<compile_context>
chip_gen: v7x
topology: tpu7x:2x2x1
jax: 0.10.0
libtpu: 0.0.40
codegen_flags: <defaults>
</compile_context>

<pallas_src>
import jax
import jax.numpy as jnp
from jax.experimental import pallas as pl
from jax.experimental.pallas import tpu as pltpu

_LANE = 128


def _round_up(x, m):
    return ((x + m - 1) // m) * m


def _make_mlp_kernel(num_layers, actv, compute_dtype):
    """Fused-MLP kernel body.

    Ref order: x_ref, (w_ref, b_ref) * num_layers, out_ref.
    `actv` is applied after every layer except the last (matching
    nn.Sequential(Linear, Act, ..., Output_Linear)).
    NOTE: `actv` must be elementwise.  Padded lanes of each hidden layer are
    0 + 0-bias; for zero-at-zero activations (ReLU/tanh/GELU) they stay 0, and
    for any elementwise actv the real outputs remain correct because the next
    layer's padded weight ROWS are zero.  A non-elementwise actv (e.g. softmax
    over the feature axis) would mix padded lanes into real outputs.
    """

    def kernel(*refs):
        x_ref = refs[0]
        out_ref = refs[-1]
        param_refs = refs[1:-1]

        # Cast to bf16 in-kernel instead of a separate wrapper-side HBM pass.
        h = x_ref[...].astype(compute_dtype)
        for layer in range(num_layers):
            w_ref = param_refs[2 * layer]
            b_ref = param_refs[2 * layer + 1]
            # bf16 x bf16 -> f32 accumulate on the MXU.
            acc = jnp.dot(h, w_ref[...], preferred_element_type=jnp.float32)
            # bf16 epilogue (bias add + activation on packed bf16 vregs).
            z = acc.astype(compute_dtype) + b_ref[...]
            if layer != num_layers - 1:
                h = actv(z)
            else:
                out_ref[...] = z.astype(out_ref.dtype)

    return kernel


def prepare_params(params, input_feature_num, compute_dtype=jnp.bfloat16):
    """Pad weights/biases to 128-lane-dense output shapes and cast to bf16.

    params: list of (W, b) with W: (in, out) f32, b: (1, out) f32.
    Returns list of (W_pad, b_pad) with
        W_pad: (prev_out_pad, round_up(out, 128)) compute_dtype
        b_pad: (1, round_up(out, 128)) compute_dtype
    The INPUT feature dim is intentionally left unpadded (see header note).
    Zero padding leaves real outputs unchanged.  Call once, reuse per forward.
    """
    padded = []
    in_pad = input_feature_num
    for w, b in params:
        in_dim, out_dim = w.shape
        out_pad = _round_up(out_dim, _LANE)
        w_p = jnp.zeros((in_pad, out_pad), compute_dtype)
        w_p = w_p.at[:in_dim, :out_dim].set(w.astype(compute_dtype))
        b_p = jnp.zeros((1, out_pad), compute_dtype)
        b_p = b_p.at[:, :out_dim].set(b.astype(compute_dtype).reshape(1, out_dim))
        padded.append((w_p, b_p))
        in_pad = out_pad
    return padded


def mlp_forward(
    x,
    padded_params,
    output_feature_num,
    actv=lambda h: jnp.maximum(h, 0.0),
    tile_rows=8192,          # big tiles amortize per-step overhead on ALL gens
    compute_dtype=jnp.bfloat16,
):
    """Run the fused MLP Pallas kernel.

    x:             (N, input_feature_num) float32 (or bf16) — passed as-is.
    padded_params: output of prepare_params().
    Returns (N, output_feature_num) in compute_dtype (bf16).  Cast to f32
    after this call if needed — the kernel is HBM-bound, so writing back f32
    would cost ~1.4-1.6x at large N.
    """
    num_layers = len(padded_params)
    n, in_dim = x.shape
    out_pad = padded_params[-1][0].shape[1]

    # Row tile: multiple of 16 (bf16 sublane tile).  Cap so the grid has at
    # least 2 steps when possible — keeps v7x's second TensorCore busy; the
    # extra step is negligible on the single-TC v5e/v6e.
    tile_n = min(tile_rows, _round_up(max(pl.cdiv(n, 2), 1), 16))
    grid = (pl.cdiv(n, tile_n),)

    kernel = _make_mlp_kernel(num_layers, actv, compute_dtype)

    # x/out stream row-tiled through the auto double-buffered pipeline; every
    # (W, b) is VMEM-resident via a constant index_map.
    in_specs = [pl.BlockSpec((tile_n, in_dim), lambda i: (i, 0))]
    flat_args = [x]
    for w, b in padded_params:
        in_specs.append(pl.BlockSpec(w.shape, lambda i: (0, 0)))
        in_specs.append(pl.BlockSpec(b.shape, lambda i: (0, 0)))
        flat_args.extend([w, b])

    out_specs = pl.BlockSpec((tile_n, out_pad), lambda i: (i, 0))

    out = pl.pallas_call(
        kernel,
        # Rows = n (not padded): Pallas masks the ragged last tile.  Do not
        # read beyond [:n, :output_feature_num].
        out_shape=jax.ShapeDtypeStruct((n, out_pad), compute_dtype),
        grid=grid,
        in_specs=in_specs,
        out_specs=out_specs,
        compiler_params=pltpu.CompilerParams(
            dimension_semantics=("parallel",),
        ),
    )(*flat_args)

    return out[:, :output_feature_num]


def init_params(key, input_feature_num, hidden_unit_nums, output_feature_num):
    """Deterministic PyTorch-style (uniform +-1/sqrt(fan_in)) Linear init.

    Returns list of (W, b); W is (in, out) (transposed vs. torch's (out, in)).
    """
    dims = [input_feature_num] + list(hidden_unit_nums) + [output_feature_num]
    params = []
    for i in range(len(dims) - 1):
        fan_in, fan_out = dims[i], dims[i + 1]
        key, kw, kb = jax.random.split(key, 3)
        bound = 1.0 / (fan_in ** 0.5)
        w = jax.random.uniform(
            kw, (fan_in, fan_out), jnp.float32, minval=-bound, maxval=bound
        )
        b = jax.random.uniform(
            kb, (1, fan_out), jnp.float32, minval=-bound, maxval=bound
        )
        params.append((w, b))
    return params


def net_forward(x_raw, params, input_feature_num, output_feature_num,
                actv=lambda h: jnp.maximum(h, 0.0)):
    """Equivalent of Net.forward: flatten to (-1, input_feature_num) then MLP.

    NOTE: `actv` must match the activation the Net was built with (ReLU here);
    a different `actv` string in the PyTorch ctor needs the matching jnp fn.
    bf16 weights/activations with f32 matmul accumulation is a deliberate
    precision tradeoff (fine at these fan-ins; re-check for very wide layers).
    For repeated calls, hoist prepare_params() out of the loop.
    """
    x = x_raw.reshape(-1, input_feature_num)
    padded_params = prepare_params(params, input_feature_num)
    return mlp_forward(x, padded_params, output_feature_num, actv=actv)


if __name__ == "__main__":
    # Net(actv='ReLU()', input_feature_num=64, hidden_unit_nums=[32, 32],
    #     output_feature_num=10)
    input_feature_num = 64
    hidden_unit_nums = [32, 32]
    output_feature_num = 10
    batch = 2

    key = jax.random.PRNGKey(0)
    key, kx = jax.random.split(key)
    # raw input e.g. (batch, 4, 4, 4) -> view(-1, 64), mirroring x.view(...)
    x_raw = jax.random.normal(kx, (batch, 4, 4, 4), dtype=jnp.float32)

    params = init_params(key, input_feature_num, hidden_unit_nums, output_feature_num)

    out = net_forward(x_raw, params, input_feature_num, output_feature_num)
    out = jax.block_until_ready(out)

    # Pure-JAX reference mirroring the kernel recipe
    # (bf16 inputs/weights, f32 MXU accumulate, bf16 bias/activation epilogue).
    h = x_raw.reshape(-1, input_feature_num).astype(jnp.bfloat16)
    for i, (w, b) in enumerate(params):
        acc = jnp.dot(h, w.astype(jnp.bfloat16), preferred_element_type=jnp.float32)
        z = acc.astype(jnp.bfloat16) + b.astype(jnp.bfloat16).reshape(1, -1)
        if i != len(params) - 1:
            h = jnp.maximum(z, 0.0)
        else:
            h = z
    ref = h

    assert out.shape == (batch, output_feature_num), out.shape
    assert out.dtype == jnp.bfloat16, out.dtype
    err = jnp.max(jnp.abs(out.astype(jnp.float32) - ref.astype(jnp.float32)))
    assert jnp.allclose(
        out.astype(jnp.float32), ref.astype(jnp.float32), atol=1e-2, rtol=1e-2
    ), float(err)

    print("KERNEL_OK")
</pallas_src>

<mosaic_0001>
module attributes {stable_mosaic.version = 11 : i64} {
  func.func @kernel(%arg0: i32, %arg1: memref<16x64xf32, #tpu.memory_space<vmem>>, %arg2: memref<64x128xbf16, #tpu.memory_space<vmem>>, %arg3: memref<1x128xbf16, #tpu.memory_space<vmem>>, %arg4: memref<128x128xbf16, #tpu.memory_space<vmem>>, %arg5: memref<1x128xbf16, #tpu.memory_space<vmem>>, %arg6: memref<128x128xbf16, #tpu.memory_space<vmem>>, %arg7: memref<1x128xbf16, #tpu.memory_space<vmem>>, %arg8: memref<16x128xbf16, #tpu.memory_space<vmem>>) attributes {dimension_semantics = [#tpu.dimension_semantics<parallel>], iteration_bounds = array<i64: 1>, scalar_prefetch = 0 : i64, scratch_operands = 0 : i64, tpu.core_type = #tpu.core_type<tc>, window_params = [{transform_indices = @transform_0, window_bounds = array<i64: 16, 64>}, {pipeline_mode = #tpu.pipeline_mode<synchronous>, transform_indices = @transform_1, window_bounds = array<i64: 64, 128>}, {pipeline_mode = #tpu.pipeline_mode<synchronous>, transform_indices = @transform_2, window_bounds = array<i64: 1, 128>}, {pipeline_mode = #tpu.pipeline_mode<synchronous>, transform_indices = @transform_3, window_bounds = array<i64: 128, 128>}, {pipeline_mode = #tpu.pipeline_mode<synchronous>, transform_indices = @transform_4, window_bounds = array<i64: 1, 128>}, {pipeline_mode = #tpu.pipeline_mode<synchronous>, transform_indices = @transform_5, window_bounds = array<i64: 128, 128>}, {pipeline_mode = #tpu.pipeline_mode<synchronous>, transform_indices = @transform_6, window_bounds = array<i64: 1, 128>}, {transform_indices = @transform_7, window_bounds = array<i64: 16, 128>}]} {
    %c0 = arith.constant 0 : index
    %c0_0 = arith.constant 0 : index
    %0 = vector.load %arg1[%c0, %c0_0] : memref<16x64xf32, #tpu.memory_space<vmem>>, vector<16x64xf32>
    %1 = arith.truncf %0 : vector<16x64xf32> to vector<16x64xbf16>
    %c0_1 = arith.constant 0 : index
    %c0_2 = arith.constant 0 : index
    %2 = vector.load %arg2[%c0_1, %c0_2] : memref<64x128xbf16, #tpu.memory_space<vmem>>, vector<64x128xbf16>
    %cst = arith.constant dense<0.000000e+00> : vector<16x128xf32>
    %3 = tpu.matmul %1, %2, %cst {dimension_numbers = #tpu.dot_dimension_numbers<[1], [0], [0], [1], [0, 0, 1, 1], [], []>} : vector<16x64xbf16>, vector<64x128xbf16>, vector<16x128xf32> -> vector<16x128xf32>
    %4 = arith.truncf %3 : vector<16x128xf32> to vector<16x128xbf16>
    %c0_3 = arith.constant 0 : index
    %c0_4 = arith.constant 0 : index
    %5 = vector.load %arg3[%c0_3, %c0_4] : memref<1x128xbf16, #tpu.memory_space<vmem>>, vector<1x128xbf16>
    %6 = vector.broadcast %5 : vector<1x128xbf16> to vector<16x128xbf16>
    %7 = arith.addf %4, %6 : vector<16x128xbf16>
    %cst_5 = arith.constant 0.000000e+00 : bf16
    %8 = vector.broadcast %cst_5 : bf16 to vector<16x128xbf16>
    %9 = arith.maximumf %7, %8 : vector<16x128xbf16>
    %c0_6 = arith.constant 0 : index
    %c0_7 = arith.constant 0 : index
    %10 = vector.load %arg4[%c0_6, %c0_7] : memref<128x128xbf16, #tpu.memory_space<vmem>>, vector<128x128xbf16>
    %cst_8 = arith.constant dense<0.000000e+00> : vector<16x128xf32>
    %11 = tpu.matmul %9, %10, %cst_8 {dimension_numbers = #tpu.dot_dimension_numbers<[1], [0], [0], [1], [0, 0, 1, 1], [], []>} : vector<16x128xbf16>, vector<128x128xbf16>, vector<16x128xf32> -> vector<16x128xf32>
    %12 = arith.truncf %11 : vector<16x128xf32> to vector<16x128xbf16>
    %c0_9 = arith.constant 0 : index
    %c0_10 = arith.constant 0 : index
    %13 = vector.load %arg5[%c0_9, %c0_10] : memref<1x128xbf16, #tpu.memory_space<vmem>>, vector<1x128xbf16>
    %14 = vector.broadcast %13 : vector<1x128xbf16> to vector<16x128xbf16>
    %15 = arith.addf %12, %14 : vector<16x128xbf16>
    %cst_11 = arith.constant 0.000000e+00 : bf16
    %16 = vector.broadcast %cst_11 : bf16 to vector<16x128xbf16>
    %17 = arith.maximumf %15, %16 : vector<16x128xbf16>
    %c0_12 = arith.constant 0 : index
    %c0_13 = arith.constant 0 : index
    %18 = vector.load %arg6[%c0_12, %c0_13] : memref<128x128xbf16, #tpu.memory_space<vmem>>, vector<128x128xbf16>
    %cst_14 = arith.constant dense<0.000000e+00> : vector<16x128xf32>
    %19 = tpu.matmul %17, %18, %cst_14 {dimension_numbers = #tpu.dot_dimension_numbers<[1], [0], [0], [1], [0, 0, 1, 1], [], []>} : vector<16x128xbf16>, vector<128x128xbf16>, vector<16x128xf32> -> vector<16x128xf32>
    %20 = arith.truncf %19 : vector<16x128xf32> to vector<16x128xbf16>
    %c0_15 = arith.constant 0 : index
    %c0_16 = arith.constant 0 : index
    %21 = vector.load %arg7[%c0_15, %c0_16] : memref<1x128xbf16, #tpu.memory_space<vmem>>, vector<1x128xbf16>
    %22 = vector.broadcast %21 : vector<1x128xbf16> to vector<16x128xbf16>
    %23 = arith.addf %20, %22 : vector<16x128xbf16>
    %c0_17 = arith.constant 0 : index
    %c0_18 = arith.constant 0 : index
    %24 = vector.load %arg8[%c0_17, %c0_18] : memref<16x128xbf16, #tpu.memory_space<vmem>>, vector<16x128xbf16>
    tpu.vector_store %arg8[%c0_17, %c0_18], %23 {strides = array<i32>} : memref<16x128xbf16, #tpu.memory_space<vmem>>, vector<16x128xbf16>,
    return
  }
  func.func @transform_0(%arg0: i32) -> (i32, i32) {
    %c0_i32 = arith.constant 0 : i32
    %c0_i32_0 = arith.constant 0 : i32
    return %arg0, %c0_i32 : i32, i32
  }
  func.func @transform_1(%arg0: i32) -> (i32, i32) {
    %c0_i32 = arith.constant 0 : i32
    %c0_i32_0 = arith.constant 0 : i32
    %c0_i32_1 = arith.constant 0 : i32
    return %c0_i32, %c0_i32_0 : i32, i32
  }
  func.func @transform_2(%arg0: i32) -> (i32, i32) {
    %c0_i32 = arith.constant 0 : i32
    %c0_i32_0 = arith.constant 0 : i32
    %c0_i32_1 = arith.constant 0 : i32
    return %c0_i32, %c0_i32_0 : i32, i32
  }
  func.func @transform_3(%arg0: i32) -> (i32, i32) {
    %c0_i32 = arith.constant 0 : i32
    %c0_i32_0 = arith.constant 0 : i32
    %c0_i32_1 = arith.constant 0 : i32
    return %c0_i32, %c0_i32_0 : i32, i32
  }
  func.func @transform_4(%arg0: i32) -> (i32, i32) {
    %c0_i32 = arith.constant 0 : i32
    %c0_i32_0 = arith.constant 0 : i32
    %c0_i32_1 = arith.constant 0 : i32
    return %c0_i32, %c0_i32_0 : i32, i32
  }
  func.func @transform_5(%arg0: i32) -> (i32, i32) {
    %c0_i32 = arith.constant 0 : i32
    %c0_i32_0 = arith.constant 0 : i32
    %c0_i32_1 = arith.constant 0 : i32
    return %c0_i32, %c0_i32_0 : i32, i32
  }
  func.func @transform_6(%arg0: i32) -> (i32, i32) {
    %c0_i32 = arith.constant 0 : i32
    %c0_i32_0 = arith.constant 0 : i32
    %c0_i32_1 = arith.constant 0 : i32
    return %c0_i32, %c0_i32_0 : i32, i32
  }
  func.func @transform_7(%arg0: i32) -> (i32, i32) {
    %c0_i32 = arith.constant 0 : i32
    %c0_i32_0 = arith.constant 0 : i32
    return %arg0, %c0_i32 : i32, i32
  }
}

</mosaic_0001>

<llo_original>
// kernel: tpu_custom_call.1
$region0: #{tpu_custom_call.1}
  #allocation0 [shape = 'u32[]', space=smem, size = 0x4, offset = 0x4, fixed_abs, tag = 'smem constant byte address 0x4 - core index']
  #allocation1 [shape = 'u32[144,128]{1,0:T(1,128)}', space=vmem, size = 0x12000, scoped, tag = 'internal scratch']
  %s0 = inlined_call_operand.hbm [shape: f32[2,64], index: 0, kind: input, shape index: {}]
  %s1 = inlined_call_operand.hbm [shape: bf16[64,128], index: 1, kind: input, shape index: {}]
  %s2 = inlined_call_operand.vmem [shape: bf16[1,128], index: 2, kind: input, shape index: {}]
  %s3 = inlined_call_operand.hbm [shape: bf16[128,128], index: 3, kind: input, shape index: {}]
  %s4 = inlined_call_operand.vmem [shape: bf16[1,128], index: 4, kind: input, shape index: {}]
  %s5 = inlined_call_operand.hbm [shape: bf16[128,128], index: 5, kind: input, shape index: {}]
  %s6 = inlined_call_operand.vmem [shape: bf16[1,128], index: 6, kind: input, shape index: {}]
  %s7 = inlined_call_operand.hbm [shape: bf16[2,128], index: 7, kind: output, shape index: {}]
  %s8 = sld [smem:[#allocation0]]
  $region54: #{tpu_custom_call.1} parent=0
    _
  %s10 = ssub.s32 1, %s8
  %s11 = scalar_select 0, %s10, %s8
  $region1: #{tpu_custom_call.1} parent=0
    #allocation2 [shape = 'u8[8192]{0}', space=vmem, size = 0x2000, scoped, tag = 'input window, operand 0, single buffered']
    #allocation3 [shape = 's32[1]{0}', space=sflag, size = 0x4, scoped, tag = 'scoped memory for tpu_custom_call.1']
    #allocation4 [shape = 's32[1]{0}', space=sflag, size = 0x4, scoped, tag = 'scoped memory for tpu_custom_call.1']
    #allocation5 [shape = 'u8[16384]{0}', space=vmem, size = 0x4000, scoped, tag = 'input window, operand 1, single buffered']
    #allocation6 [shape = 's32[1]{0}', space=sflag, size = 0x4, scoped, tag = 'scoped memory for tpu_custom_call.1']
    #allocation7 [shape = 'u8[32768]{0}', space=vmem, size = 0x8000, scoped, tag = 'input window, operand 3, single buffered']
    #allocation8 [shape = 'u8[32768]{0}', space=vmem, size = 0x8000, scoped, tag = 'input window, operand 5, single buffered']
    #allocation9 [shape = 's32[1]{0}', space=sflag, size = 0x4, scoped, tag = 'scoped memory for tpu_custom_call.1']
    #allocation10 [shape = 'u8[4096]{0}', space=vmem, size = 0x1000, scoped, tag = 'output window, operand 0, single buffered']
    %12 = vsyncpa [#allocation3], 0
    %13 = vsyncpa [#allocation6], 0
    %14 = vsyncpa [#allocation9], 0
    %15 = vsyncpa [#allocation4], 0
    // Predicated region
    $region2: #{tpu_custom_call.1} parent=1 // pred_check
      _
    $region3: #{tpu_custom_call.1} parent=1 // pred_check_branch
      %17 = sbr.rel (0) target = $region5
    $region4: #{tpu_custom_call.1} parent=1 // pred_region
      %s19 = ssub.s32 256, 32
      %20 = vsyncadd [#allocation3], %s19
      %s21 = sshll.u32 [#allocation2], 4
      %s22 = int_to_ptr.vmem [resolvable:$true] %s21
      %27 = dma.hbm_to_vmem [thread:$0]  %s0, 32, %s22, [#allocation3], 32, 32, 2
    $region5: #{tpu_custom_call.1} parent=1 // pred_fallthru
      _
    // Predicated region
    $region6: #{tpu_custom_call.1} parent=1 // pred_check
      _
    $region7: #{tpu_custom_call.1} parent=1 // pred_check_branch
      %29 = sbr.rel (0) target = $region9
    $region8: #{tpu_custom_call.1} parent=1 // pred_region
      %s31 = ssub.s32 512, 512
      %32 = vsyncadd [#allocation6], %s31
      %s33 = sshll.u32 [#allocation5], 4
      %s34 = int_to_ptr.vmem [resolvable:$true] %s33
      %39 = dma.hbm_to_vmem [thread:$0]  %s1, 512, %s34, [#allocation6], 64, 64, 4
    $region9: #{tpu_custom_call.1} parent=1 // pred_fallthru
      _
    // Predicated region
    $region10: #{tpu_custom_call.1} parent=1 // pred_check
      _
    $region11: #{tpu_custom_call.1} parent=1 // pred_check_branch
      %41 = sbr.rel (0) target = $region13
    $region12: #{tpu_custom_call.1} parent=1 // pred_region
      _
    $region13: #{tpu_custom_call.1} parent=1 // pred_fallthru
      _
    // Predicated region
    $region14: #{tpu_custom_call.1} parent=1 // pred_check
      _
    $region15: #{tpu_custom_call.1} parent=1 // pred_check_branch
      %43 = sbr.rel (0) target = $region17
    $region16: #{tpu_custom_call.1} parent=1 // pred_region
      %s45 = ssub.s32 1024, 1024
      %46 = vsyncadd [#allocation6], %s45
      %s47 = sshll.u32 [#allocation7], 4
      %s48 = int_to_ptr.vmem [resolvable:$true] %s47
      %53 = dma.hbm_to_vmem [thread:$0]  %s3, 1024, %s48, [#allocation6], 64, 64, 4
    $region17: #{tpu_custom_call.1} parent=1 // pred_fallthru
      _
    // Predicated region
    $region18: #{tpu_custom_call.1} parent=1 // pred_check
      _
    $region19: #{tpu_custom_call.1} parent=1 // pred_check_branch
      %55 = sbr.rel (0) target = $region21
    $region20: #{tpu_custom_call.1} parent=1 // pred_region
      _
    $region21: #{tpu_custom_call.1} parent=1 // pred_fallthru
      _
    // Predicated region
    $region22: #{tpu_custom_call.1} parent=1 // pred_check
      _
    $region23: #{tpu_custom_call.1} parent=1 // pred_check_branch
      %57 = sbr.rel (0) target = $region25
    $region24: #{tpu_custom_call.1} parent=1 // pred_region
      %s59 = ssub.s32 1024, 1024
      %60 = vsyncadd [#allocation9], %s59
      %s61 = sshll.u32 [#allocation8], 4
      %s62 = int_to_ptr.vmem [resolvable:$true] %s61
      %67 = dma.hbm_to_vmem [thread:$0]  %s5, 1024, %s62, [#allocation9], 64, 64, 4
    $region25: #{tpu_custom_call.1} parent=1 // pred_fallthru
      _
    // Predicated region
    $region26: #{tpu_custom_call.1} parent=1 // pred_check
      _
    $region27: #{tpu_custom_call.1} parent=1 // pred_check_branch
      %69 = sbr.rel (0) target = $region29
    $region28: #{tpu_custom_call.1} parent=1 // pred_region
      _
    $region29: #{tpu_custom_call.1} parent=1 // pred_fallthru
      _
    // Predicated region
    $region30: #{tpu_custom_call.1} parent=1 // pred_check
      _
    $region31: #{tpu_custom_call.1} parent=1 // pred_check_branch
      %71 = sbr.rel (0) target = $region33
    $region32: #{tpu_custom_call.1} parent=1 // pred_region
      %72 = dma.done [#allocation3], 256
    $region33: #{tpu_custom_call.1} parent=1 // pred_fallthru
      _
    // Predicated region
    $region34: #{tpu_custom_call.1} parent=1 // pred_check
      _
    $region35: #{tpu_custom_call.1} parent=1 // pred_check_branch
      %74 = sbr.rel (0) target = $region37
    $region36: #{tpu_custom_call.1} parent=1 // pred_region
      %75 = dma.done [#allocation6], 512
    $region37: #{tpu_custom_call.1} parent=1 // pred_fallthru
      _
    // Predicated region
    $region38: #{tpu_custom_call.1} parent=1 // pred_check
      _
    $region39: #{tpu_custom_call.1} parent=1 // pred_check_branch
      %77 = sbr.rel (0) target = $region41
    $region40: #{tpu_custom_call.1} parent=1 // pred_region
      %78 = dma.done [#allocation6], 1024
    $region41: #{tpu_custom_call.1} parent=1 // pred_fallthru
      _
    // Predicated region
    $region42: #{tpu_custom_call.1} parent=1 // pred_check
      _
    $region43: #{tpu_custom_call.1} parent=1 // pred_check_branch
      %80 = sbr.rel (0) target = $region45
    $region44: #{tpu_custom_call.1} parent=1 // pred_region
      %81 = dma.done [#allocation9], 1024
    $region45: #{tpu_custom_call.1} parent=1 // pred_fallthru
      _
    %v83 = vld [vmem:[#allocation2] sm:$0xff]
    %v84 = vld [vmem:[#allocation2 + $0x8] sm:$0xff]
    %v85 = vpack.c.bf16 %v84, %v83
    %v86 = vld [vmem:[#allocation5] sm:$0xf]
    %v87 = vld [vmem:[#allocation5 + $0x4] sm:$0xf]
    %v88 = vld [vmem:[#allocation5 + $0x8] sm:$0xf]
    %v89 = vld [vmem:[#allocation5 + $0xc] sm:$0xf]
    %v90 = vld [vmem:[#allocation5 + $0x10] sm:$0xf]
    %v91 = vld [vmem:[#allocation5 + $0x14] sm:$0xf]
    %v92 = vld [vmem:[#allocation5 + $0x18] sm:$0xf]
    %v93 = vld [vmem:[#allocation5 + $0x1c] sm:$0xf]
    %v102 = vunpack.c.l.b16 %v86
    %v103 = vunpack.c.l.b16 %v87
    %v104 = vunpack.c.l.b16 %v88
    %v105 = vunpack.c.l.b16 %v89
    %v106 = vunpack.c.l.b16 %v90
    %v107 = vunpack.c.l.b16 %v91
    %v108 = vunpack.c.l.b16 %v92
    %v109 = vunpack.c.l.b16 %v93
    %v110 = vpack.c.b16 %v103, %v102
    %v111 = vpack.c.b16 %v105, %v104
    %v112 = vpack.c.b16 %v107, %v106
    %v113 = vpack.c.b16 %v109, %v108
    %vm118 = vcmask 523264
    %v120 = vsel %vm118, %v85, 0
    %122 = vmatprep.subr.bf16.mxu0 0
    %123 = vmatpush1.bf16.msra.mxu0 %v110
    %124 = vmatprep.subr.bf16.mxu0 0
    %125 = vmatpush1.bf16.msra.mxu0 %v111
    %126 = vmatprep.subr.bf16.mxu0 0
    %127 = vmatpush1.bf16.msra.mxu0 %v112
    %128 = vmatprep.subr.bf16.mxu0 0
    %129 = vmatpush1.bf16.msra.mxu0 %v113
    %130 = vmatprep.subr.bf16.mxu0 0
    %131 = vmatpush1.bf16.msra.mxu0 0
    %132 = vmatprep.subr.bf16.mxu0 0
    %133 = vmatpush1.bf16.msra.mxu0 0
    %134 = vmatprep.subr.bf16.mxu0 0
    %135 = vmatpush1.bf16.msra.mxu0 0
    %136 = vmatprep.subr.bf16.mxu0 0
    %137 = vmatpush1.bf16.msra.mxu0 0
    %138 = vmatprep.subr.bf16.mxu0 0
    %139 = vmatpush1.bf16.msra.mxu0 0
    %140 = vmatprep.subr.bf16.mxu0 0
    %141 = vmatpush1.bf16.msra.mxu0 0
    %142 = vmatprep.subr.bf16.mxu0 0
    %143 = vmatpush1.bf16.msra.mxu0 0
    %144 = vmatprep.subr.bf16.mxu0 0
    %145 = vmatpush1.bf16.msra.mxu0 0
    %146 = vmatprep.subr.bf16.mxu0 0
    %147 = vmatpush1.bf16.msra.mxu0 0
    %148 = vmatprep.subr.bf16.mxu0 0
    %149 = vmatpush1.bf16.msra.mxu0 0
    %150 = vmatprep.subr.bf16.mxu0 0
    %151 = vmatpush1.bf16.msra.mxu0 0
    %152 = vmatprep.subr.bf16.mxu0 0
    %153 = vmatpush1.bf16.msra.mxu0 0
    %154 = vmatprep.mubr.bf16.mxu0 0
    %155 = vmatmul.mubr.bf16.gmra.mrb[0].mxu0 %v120
    %v156 = vpop.f32.mrb[0].mxu0
    %v157 = vadd.f32 0.0, %v156
    %v158 = vpop.f32.mrb[0].mxu0
    %v159 = vpop.f32.mrb[0].mxu0
    %v160 = vadd.f32 0.0, %v159
    %v161 = vpop.f32.mrb[0].mxu0
    %162 = vdwg.mxu0
    %v163 = vpack.c.bf16 %v160, %v157
    %v164 = vld [vmem:[%s2] sm:$0x1]
    %v166 = vpack.i.b16 %v164, %v164
    %v168 = vlaneseq
    %v169 = vshrl.u32 %v168, 7
    %v170 = vsub.s32 0, %v169
    %v171 = vrot.slane %v166, %v170
    %v172 = vadd.bf16 %v163, %v171
    %v173 = vmax.bf16 %v172, 0
    %v174 = vld [vmem:[#allocation7] sm:$0xf]
    %v175 = vld [vmem:[#allocation7 + $0x4] sm:$0xf]
    %v176 = vld [vmem:[#allocation7 + $0x8] sm:$0xf]
    %v177 = vld [vmem:[#allocation7 + $0xc] sm:$0xf]
    %v178 = vld [vmem:[#allocation7 + $0x10] sm:$0xf]
    %v179 = vld [vmem:[#allocation7 + $0x14] sm:$0xf]
    %v180 = vld [vmem:[#allocation7 + $0x18] sm:$0xf]
    %v181 = vld [vmem:[#allocation7 + $0x1c] sm:$0xf]
    %v182 = vld [vmem:[#allocation7 + $0x20] sm:$0xf]
    %v183 = vld [vmem:[#allocation7 + $0x24] sm:$0xf]
    %v184 = vld [vmem:[#allocation7 + $0x28] sm:$0xf]
    %v185 = vld [vmem:[#allocation7 + $0x2c] sm:$0xf]
    %v186 = vld [vmem:[#allocation7 + $0x30] sm:$0xf]
    %v187 = vld [vmem:[#allocation7 + $0x34] sm:$0xf]
    %v188 = vld [vmem:[#allocation7 + $0x38] sm:$0xf]
    %v189 = vld [vmem:[#allocation7 + $0x3c] sm:$0xf]
    %v206 = vunpack.c.l.b16 %v174
    %v207 = vunpack.c.l.b16 %v175
    %v208 = vunpack.c.l.b16 %v176
    %v209 = vunpack.c.l.b16 %v177
    %v210 = vunpack.c.l.b16 %v178
    %v211 = vunpack.c.l.b16 %v179
    %v212 = vunpack.c.l.b16 %v180
    %v213 = vunpack.c.l.b16 %v181
    %v214 = vunpack.c.l.b16 %v182
    %v215 = vunpack.c.l.b16 %v183
    %v216 = vunpack.c.l.b16 %v184
    %v217 = vunpack.c.l.b16 %v185
    %v218 = vunpack.c.l.b16 %v186
    %v219 = vunpack.c.l.b16 %v187
    %v220 = vunpack.c.l.b16 %v188
    %v221 = vunpack.c.l.b16 %v189
    %v222 = vpack.c.b16 %v207, %v206
    %v223 = vpack.c.b16 %v209, %v208
    %v224 = vpack.c.b16 %v211, %v210
    %v225 = vpack.c.b16 %v213, %v212
    %v226 = vpack.c.b16 %v215, %v214
    %v227 = vpack.c.b16 %v217, %v216
    %v228 = vpack.c.b16 %v219, %v218
    %v229 = vpack.c.b16 %v221, %v220
    %238 = vmatprep.subr.bf16.mxu0 0
    %239 = vmatpush1.bf16.msra.mxu0 %v222
    %240 = vmatprep.subr.bf16.mxu0 0
    %241 = vmatpush1.bf16.msra.mxu0 %v223
    %242 = vmatprep.subr.bf16.mxu0 0
    %243 = vmatpush1.bf16.msra.mxu0 %v224
    %244 = vmatprep.subr.bf16.mxu0 0
    %245 = vmatpush1.bf16.msra.mxu0 %v225
    %246 = vmatprep.subr.bf16.mxu0 0
    %247 = vmatpush1.bf16.msra.mxu0 %v226
    %248 = vmatprep.subr.bf16.mxu0 0
    %249 = vmatpush1.bf16.msra.mxu0 %v227
    %250 = vmatprep.subr.bf16.mxu0 0
    %251 = vmatpush1.bf16.msra.mxu0 %v228
    %252 = vmatprep.subr.bf16.mxu0 0
    %253 = vmatpush1.bf16.msra.mxu0 %v229
    %254 = vmatprep.subr.bf16.mxu0 0
    %255 = vmatpush1.bf16.msra.mxu0 0
    %256 = vmatprep.subr.bf16.mxu0 0
    %257 = vmatpush1.bf16.msra.mxu0 0
    %258 = vmatprep.subr.bf16.mxu0 0
    %259 = vmatpush1.bf16.msra.mxu0 0
    %260 = vmatprep.subr.bf16.mxu0 0
    %261 = vmatpush1.bf16.msra.mxu0 0
    %262 = vmatprep.subr.bf16.mxu0 0
    %263 = vmatpush1.bf16.msra.mxu0 0
    %264 = vmatprep.subr.bf16.mxu0 0
    %265 = vmatpush1.bf16.msra.mxu0 0
    %266 = vmatprep.subr.bf16.mxu0 0
    %267 = vmatpush1.bf16.msra.mxu0 0
    %268 = vmatprep.subr.bf16.mxu0 0
    %269 = vmatpush1.bf16.msra.mxu0 0
    %270 = vmatprep.mubr.bf16.mxu0 0
    %271 = vmatmul.mubr.bf16.gmra.mrb[0].mxu0 %v173
    %v272 = vpop.f32.mrb[0].mxu0
    %v273 = vadd.f32 0.0, %v272
    %v274 = vpop.f32.mrb[0].mxu0
    %v275 = vpop.f32.mrb[0].mxu0
    %v276 = vadd.f32 0.0, %v275
    %v277 = vpop.f32.mrb[0].mxu0
    %278 = vdwg.mxu0
    %v279 = vpack.c.bf16 %v276, %v273
    %v280 = vld [vmem:[%s4] sm:$0x1]
    %v282 = vpack.i.b16 %v280, %v280
    %v284 = vlaneseq
    %v285 = vshrl.u32 %v284, 7
    %v286 = vsub.s32 0, %v285
    %v287 = vrot.slane %v282, %v286
    %v288 = vadd.bf16 %v279, %v287
    %v289 = vmax.bf16 %v288, 0
    %v290 = vld [vmem:[#allocation8] sm:$0xf]
    %v291 = vld [vmem:[#allocation8 + $0x4] sm:$0xf]
    %v292 = vld [vmem:[#allocation8 + $0x8] sm:$0xf]
    %v293 = vld [vmem:[#allocation8 + $0xc] sm:$0xf]
    %v294 = vld [vmem:[#allocation8 + $0x10] sm:$0xf]
    %v295 = vld [vmem:[#allocation8 + $0x14] sm:$0xf]
    %v296 = vld [vmem:[#allocation8 + $0x18] sm:$0xf]
    %v297 = vld [vmem:[#allocation8 + $0x1c] sm:$0xf]
    %v298 = vld [vmem:[#allocation8 + $0x20] sm:$0xf]
    %v299 = vld [vmem:[#allocation8 + $0x24] sm:$0xf]
    %v300 = vld [vmem:[#allocation8 + $0x28] sm:$0xf]
    %v301 = vld [vmem:[#allocation8 + $0x2c] sm:$0xf]
    %v302 = vld [vmem:[#allocation8 + $0x30] sm:$0xf]
    %v303 = vld [vmem:[#allocation8 + $0x34] sm:$0xf]
    %v304 = vld [vmem:[#allocation8 + $0x38] sm:$0xf]
    %v305 = vld [vmem:[#allocation8 + $0x3c] sm:$0xf]
    %v322 = vunpack.c.l.b16 %v290
    %v323 = vunpack.c.l.b16 %v291
    %v324 = vunpack.c.l.b16 %v292
    %v325 = vunpack.c.l.b16 %v293
    %v326 = vunpack.c.l.b16 %v294
    %v327 = vunpack.c.l.b16 %v295
    %v328 = vunpack.c.l.b16 %v296
    %v329 = vunpack.c.l.b16 %v297
    %v330 = vunpack.c.l.b16 %v298
    %v331 = vunpack.c.l.b16 %v299
    %v332 = vunpack.c.l.b16 %v300
    %v333 = vunpack.c.l.b16 %v301
    %v334 = vunpack.c.l.b16 %v302
    %v335 = vunpack.c.l.b16 %v303
    %v336 = vunpack.c.l.b16 %v304
    %v337 = vunpack.c.l.b16 %v305
    %v338 = vpack.c.b16 %v323, %v322
    %v339 = vpack.c.b16 %v325, %v324
    %v340 = vpack.c.b16 %v327, %v326
    %v341 = vpack.c.b16 %v329, %v328
    %v342 = vpack.c.b16 %v331, %v330
    %v343 = vpack.c.b16 %v333, %v332
    %v344 = vpack.c.b16 %v335, %v334
    %v345 = vpack.c.b16 %v337, %v336
    %354 = vmatprep.subr.bf16.mxu0 0
    %355 = vmatpush1.bf16.msra.mxu0 %v338
    %356 = vmatprep.subr.bf16.mxu0 0
    %357 = vmatpush1.bf16.msra.mxu0 %v339
    %358 = vmatprep.subr.bf16.mxu0 0
    %359 = vmatpush1.bf16.msra.mxu0 %v340
    %360 = vmatprep.subr.bf16.mxu0 0
    %361 = vmatpush1.bf16.msra.mxu0 %v341
    %362 = vmatprep.subr.bf16.mxu0 0
    %363 = vmatpush1.bf16.msra.mxu0 %v342
    %364 = vmatprep.subr.bf16.mxu0 0
    %365 = vmatpush1.bf16.msra.mxu0 %v343
    %366 = vmatprep.subr.bf16.mxu0 0
    %367 = vmatpush1.bf16.msra.mxu0 %v344
    %368 = vmatprep.subr.bf16.mxu0 0
    %369 = vmatpush1.bf16.msra.mxu0 %v345
    %370 = vmatprep.subr.bf16.mxu0 0
    %371 = vmatpush1.bf16.msra.mxu0 0
    %372 = vmatprep.subr.bf16.mxu0 0
    %373 = vmatpush1.bf16.msra.mxu0 0
    %374 = vmatprep.subr.bf16.mxu0 0
    %375 = vmatpush1.bf16.msra.mxu0 0
    %376 = vmatprep.subr.bf16.mxu0 0
    %377 = vmatpush1.bf16.msra.mxu0 0
    %378 = vmatprep.subr.bf16.mxu0 0
    %379 = vmatpush1.bf16.msra.mxu0 0
    %380 = vmatprep.subr.bf16.mxu0 0
    %381 = vmatpush1.bf16.msra.mxu0 0
    %382 = vmatprep.subr.bf16.mxu0 0
    %383 = vmatpush1.bf16.msra.mxu0 0
    %384 = vmatprep.subr.bf16.mxu0 0
    %385 = vmatpush1.bf16.msra.mxu0 0
    %386 = vmatprep.mubr.bf16.mxu0 0
    %387 = vmatmul.mubr.bf16.gmra.mrb[0].mxu0 %v289
    %v388 = vpop.f32.mrb[0].mxu0
    %v389 = vadd.f32 0.0, %v388
    %v390 = vpop.f32.mrb[0].mxu0
    %v391 = vpop.f32.mrb[0].mxu0
    %v392 = vadd.f32 0.0, %v391
    %v393 = vpop.f32.mrb[0].mxu0
    %394 = vdwg.mxu0
    %v395 = vpack.c.bf16 %v392, %v389
    %v396 = vld [vmem:[%s6] sm:$0x1]
    %v398 = vpack.i.b16 %v396, %v396
    %v400 = vlaneseq
    %v401 = vshrl.u32 %v400, 7
    %v402 = vsub.s32 0, %v401
    %v403 = vrot.slane %v398, %v402
    %v404 = vadd.bf16 %v395, %v403
    %v406 = vcombine.high %v404, %v404
    %v408 = vunpack.c.l.s4 1966171168
    %v409 = vunpack.c.0.s8 %v408
    %v410 = vlaneseq
    %v411 = vshrl.u32 %v410, 7
    %v412 = vsub.s32 %v409, %v411
    %v413 = vrot.slane %v404, %v412
    %v415 = vunpack.c.l.s4 1966171168
    %v416 = vunpack.c.0.s8 %v415
    %v417 = vlaneseq
    %v418 = vshrl.u32 %v417, 7
    %v419 = vsub.s32 %v416, %v418
    %v420 = vrot.slane %v406, %v419
    %v421 = vcombine.high %v413, %v413
    %v422 = vcombine.high %v420, %v420
    %v424 = vunpack.c.l.s4 1966171168
    %v425 = vunpack.c.0.s8 %v424
    %v426 = vlaneseq
    %v427 = vshrl.u32 %v426, 7
    %v428 = vsub.s32 %v425, %v427
    %v429 = vrot.slane %v413, %v428
    %v431 = vunpack.c.l.s4 1966171168
    %v432 = vunpack.c.0.s8 %v431
    %v433 = vlaneseq
    %v434 = vshrl.u32 %v433, 7
    %v435 = vsub.s32 %v432, %v434
    %v436 = vrot.slane %v420, %v435
    %v438 = vunpack.c.l.s4 1966171168
    %v439 = vunpack.c.0.s8 %v438
    %v440 = vlaneseq
    %v441 = vshrl.u32 %v440, 7
    %v442 = vsub.s32 %v439, %v441
    %v443 = vrot.slane %v421, %v442
    %v445 = vunpack.c.l.s4 1966171168
    %v446 = vunpack.c.0.s8 %v445
    %v447 = vlaneseq
    %v448 = vshrl.u32 %v447, 7
    %v449 = vsub.s32 %v446, %v448
    %v450 = vrot.slane %v422, %v449
    %v451 = vcombine.high %v429, %v429
    %v452 = vcombine.high %v436, %v436
    %v453 = vcombine.high %v443, %v443
    %v454 = vcombine.high %v450, %v450
    %463 = vst [vmem:[#allocation10] sm:$0x1] %v429
    %464 = vst [vmem:[#allocation10 + $0x1] sm:$0x1] %v443
    %465 = vst [vmem:[#allocation10 + $0x2] sm:$0x1] %v451
    %466 = vst [vmem:[#allocation10 + $0x3] sm:$0x1] %v453
    %467 = vst [vmem:[#allocation10 + $0x4] sm:$0x1] %v436
    %468 = vst [vmem:[#allocation10 + $0x5] sm:$0x1] %v450
    %469 = vst [vmem:[#allocation10 + $0x6] sm:$0x1] %v452
    %470 = vst [vmem:[#allocation10 + $0x7] sm:$0x1] %v454
    // Predicated region
    $region46: #{tpu_custom_call.1} parent=1 // pred_check
      _
    $region47: #{tpu_custom_call.1} parent=1 // pred_check_branch
      %472 = sbr.rel (0) target = $region49
    $region48: #{tpu_custom_call.1} parent=1 // pred_region
      %s474 = ssub.s32 128, 16
      %475 = vsyncadd [#allocation4], %s474
      %s476 = sshll.u32 [#allocation10], 4
      %s477 = int_to_ptr.vmem [resolvable:$true] %s476
      %482 = dma.vmem_to_hbm [thread:$0]  %s477, 16, %s7, [#allocation4], 16, 16, 1
    $region49: #{tpu_custom_call.1} parent=1 // pred_fallthru
      _
    // Predicated region
    $region50: #{tpu_custom_call.1} parent=1 // pred_check
      _
    $region51: #{tpu_custom_call.1} parent=1 // pred_check_branch
      %484 = sbr.rel (0) target = $region53
    $region52: #{tpu_custom_call.1} parent=1 // pred_region
      %485 = dma.done [#allocation4], 128
    $region53: #{tpu_custom_call.1} parent=1 // pred_fallthru
      _
    %486 = vsyncpa [#allocation3], 1
    %487 = vsyncpa [#allocation6], 1
    %488 = vsyncpa [#allocation9], 1
    %489 = vsyncpa [#allocation4], 1

</llo_original>
